<compile_context>
chip_gen: v7x
topology: tpu7x:2x2x1
jax: 0.10.0
libtpu: 0.0.40
codegen_flags: <defaults>
</compile_context>

<pallas_src>
import math

import jax
import jax.numpy as jnp
from jax import lax
from jax.experimental import pallas as pl
from jax.experimental.pallas import tpu as pltpu


def _pick_tile(dim, pref):
    """Prefer `pref` when it exactly tiles `dim`; otherwise use the full dim."""
    if dim >= pref and dim % pref == 0:
        return pref
    return dim


# ----------------------------- Linear kernels --------------------------------
def _linear_kernel_k1(x_ref, w_ref, b_ref, o_ref):
    # Single K step: no accumulator scratch / init / finalize needed.
    acc = jnp.dot(
        x_ref[...].astype(jnp.bfloat16),
        w_ref[...].astype(jnp.bfloat16),
        preferred_element_type=jnp.float32,
    )
    o_ref[...] = (acc + b_ref[...].astype(jnp.float32)).astype(o_ref.dtype)


def _linear_kernel(x_ref, w_ref, b_ref, o_ref, acc_ref):
    k = pl.program_id(2)

    @pl.when(k == 0)
    def _():
        acc_ref[...] = jnp.zeros_like(acc_ref)

    # bf16 operands into the MXU, f32 accumulation.
    acc_ref[...] += jnp.dot(
        x_ref[...].astype(jnp.bfloat16),
        w_ref[...].astype(jnp.bfloat16),
        preferred_element_type=jnp.float32,
    )

    @pl.when(k == pl.num_programs(2) - 1)
    def _():
        o_ref[...] = (acc_ref[...] + b_ref[...].astype(jnp.float32)).astype(
            o_ref.dtype
        )


def linear(x2d, w, b, *, tm=512, tn=768, tk=768, out_dtype=None):
    """y = x2d @ w + b, tiled over (M, N[, K]) with bf16 MXU operands.

    Note: storing the weights in bf16 at parameter time would additionally halve
    their HBM traffic; here the cast happens in-kernel so f32 params stay valid.
    """
    M, K = x2d.shape
    N = w.shape[1]
    out_dtype = out_dtype if out_dtype is not None else x2d.dtype
    tm = _pick_tile(M, tm)
    tn = _pick_tile(N, tn)
    tk = _pick_tile(K, tk)
    nm, nn, nk = M // tm, N // tn, K // tk

    xb = jnp.dtype(x2d.dtype).itemsize
    wb = jnp.dtype(w.dtype).itemsize
    ob = jnp.dtype(out_dtype).itemsize
    flops = 2 * M * N * K + M * N
    bytes_accessed = (
        xb * M * K * nn  # x re-read per N tile
        + wb * K * N * nm  # w re-read per M tile
        + ob * M * N  # output
        + 4 * N * nm  # bias
    )
    cost = pl.CostEstimate(
        flops=flops, transcendentals=0, bytes_accessed=bytes_accessed
    )
    b2d = b.reshape(1, N)

    if nk == 1:
        return pl.pallas_call(
            _linear_kernel_k1,
            out_shape=jax.ShapeDtypeStruct((M, N), out_dtype),
            grid=(nm, nn),
            in_specs=[
                pl.BlockSpec((tm, tk), lambda i, j: (i, 0)),
                pl.BlockSpec((tk, tn), lambda i, j: (0, j)),
                pl.BlockSpec((1, tn), lambda i, j: (0, j)),
            ],
            out_specs=pl.BlockSpec((tm, tn), lambda i, j: (i, j)),
            compiler_params=pltpu.CompilerParams(
                dimension_semantics=("parallel", "parallel")
            ),
            cost_estimate=cost,
        )(x2d, w, b2d)

    return pl.pallas_call(
        _linear_kernel,
        out_shape=jax.ShapeDtypeStruct((M, N), out_dtype),
        grid=(nm, nn, nk),
        in_specs=[
            pl.BlockSpec((tm, tk), lambda i, j, k: (i, k)),
            pl.BlockSpec((tk, tn), lambda i, j, k: (k, j)),
            pl.BlockSpec((1, tn), lambda i, j, k: (0, j)),
        ],
        out_specs=pl.BlockSpec((tm, tn), lambda i, j, k: (i, j)),
        scratch_shapes=[pltpu.VMEM((tm, tn), jnp.float32)],
        compiler_params=pltpu.CompilerParams(
            dimension_semantics=("parallel", "parallel", "arbitrary")
        ),
        cost_estimate=cost,
    )(x2d, w, b2d)


# --------------------------- Flash attention kernel ---------------------------
def _flash_attn_kernel(q_ref, k_ref, v_ref, o_ref, m_sc, l_sc, acc_sc):
    qi = pl.program_id(2)
    ki = pl.program_id(3)
    num_kv = pl.num_programs(3)

    tq, d = q_ref.shape[3], q_ref.shape[4]
    tkv = k_ref.shape[3]
    scale = 1.0 / math.sqrt(d)

    q_start = qi * tq
    kv_start = ki * tkv

    @pl.when(ki == 0)
    def _():
        m_sc[...] = jnp.full_like(m_sc, -jnp.inf)
        l_sc[...] = jnp.zeros_like(l_sc)
        acc_sc[...] = jnp.zeros_like(acc_sc)

    # Causal tile classification:
    #   needed : tile has at least one unmasked (row, col) pair -> do compute
    #   full   : tile lies entirely on/below the diagonal       -> skip mask
    needed = kv_start <= q_start + (tq - 1)
    full = kv_start + (tkv - 1) <= q_start

    @pl.when(needed)
    def _():
        # Fold 1/sqrt(D) into q (scales (tq, D) instead of (tq, tkv)); feed the
        # MXU bf16 operands, accumulate in f32.
        q = (q_ref[0, 0, 0].astype(jnp.float32) * scale).astype(jnp.bfloat16)
        k = k_ref[0, 0, 0].astype(jnp.bfloat16)
        v = v_ref[0, 0, 0].astype(jnp.bfloat16)

        # q @ k^T without an explicit transpose: contract last dims of both.
        s = lax.dot_general(
            q,
            k,
            dimension_numbers=(((1,), (1,)), ((), ())),
            preferred_element_type=jnp.float32,
        )

        def online_softmax_update(scores):
            m_prev = m_sc[...]
            m_new = jnp.maximum(m_prev, scores.max(axis=-1, keepdims=True))
            alpha = jnp.exp(m_prev - m_new)
            p = jnp.exp(scores - m_new)
            l_sc[...] = alpha * l_sc[...] + p.sum(axis=-1, keepdims=True)
            acc_sc[...] = alpha * acc_sc[...] + jnp.dot(
                p.astype(jnp.bfloat16), v, preferred_element_type=jnp.float32
            )
            m_sc[...] = m_new

        @pl.when(full)
        def _():
            online_softmax_update(s)

        @pl.when(jnp.logical_not(full))
        def _():
            row = q_start + lax.broadcasted_iota(jnp.int32, (tq, tkv), 0)
            col = kv_start + lax.broadcasted_iota(jnp.int32, (tq, tkv), 1)
            # Large finite negative (not -inf) so all-masked rows never NaN if
            # this kernel is reused with non-causal masks.
            online_softmax_update(jnp.where(col <= row, s, -1e30))

    @pl.when(ki == num_kv - 1)
    def _():
        inv_l = pl.reciprocal(l_sc[...], approx=True)
        o_ref[0, 0] = (acc_sc[...] * inv_l).astype(o_ref.dtype)


def flash_attention(qkv, *, tq=256, tkv=512):
    """Causal multi-head attention.

    qkv: (B, 3, nH, S, D) — q/k/v selection is done by the BlockSpec index_maps
    (index 0/1/2 along the packed axis), so no per-tensor transposes in JAX.
    The K/V index_maps clamp the KV block index to the last causally-needed
    block for the current query tile, so upper-triangle tiles are never DMA'd.
    Returns (B, nH, S, D) in qkv.dtype.
    """
    B, three, H, S, D = qkv.shape
    assert three == 3
    tq = _pick_tile(S, tq)
    tkv = _pick_tile(S, tkv)
    n_q, n_kv = S // tq, S // tkv
    grid = (B, H, n_q, n_kv)

    def _kv_block(qi, ki):
        # Last KV block containing any unmasked column for query tile qi.
        last_needed = (qi * tq + (tq - 1)) // tkv
        return jnp.minimum(ki, last_needed)

    itemsize = jnp.dtype(qkv.dtype).itemsize
    flops = 2 * B * H * S * S * D  # ~causal half of dense q@k^T + p@v
    transcendentals = B * H * S * S // 2
    bytes_accessed = itemsize * (
        B * H * S * D * n_kv  # q re-read per KV step
        + B * H * S * D * n_q  # k, v (causal clamp ~halves the dense re-read)
        + B * H * S * D  # output
    )

    return pl.pallas_call(
        _flash_attn_kernel,
        out_shape=jax.ShapeDtypeStruct((B, H, S, D), qkv.dtype),
        grid=grid,
        in_specs=[
            pl.BlockSpec(
                (1, 1, 1, tq, D), lambda b, h, qi, ki: (b, 0, h, qi, 0)
            ),
            pl.BlockSpec(
                (1, 1, 1, tkv, D),
                lambda b, h, qi, ki: (b, 1, h, _kv_block(qi, ki), 0),
            ),
            pl.BlockSpec(
                (1, 1, 1, tkv, D),
                lambda b, h, qi, ki: (b, 2, h, _kv_block(qi, ki), 0),
            ),
        ],
        out_specs=pl.BlockSpec((1, 1, tq, D), lambda b, h, qi, ki: (b, h, qi, 0)),
        scratch_shapes=[
            pltpu.VMEM((tq, 1), jnp.float32),  # running max
            pltpu.VMEM((tq, 1), jnp.float32),  # running sum
            pltpu.VMEM((tq, D), jnp.float32),  # output accumulator
        ],
        compiler_params=pltpu.CompilerParams(
            dimension_semantics=("parallel", "parallel", "parallel", "arbitrary")
        ),
        cost_estimate=pl.CostEstimate(
            flops=flops,
            transcendentals=transcendentals,
            bytes_accessed=bytes_accessed,
        ),
    )(qkv, qkv, qkv)
    # TODO(synk): for long S, replace the rectangular (Sq, Skv) grid with a
    # triangular flattened grid via PrefetchScalarGridSpec so skipped tiles
    # don't even pay per-step pipeline overhead.


# ------------------------- GPT2Attention forward ------------------------------
def gpt2_attention_forward(x, params, num_heads):
    B, S, H = x.shape
    D = H // num_heads

    x2d = x.reshape(B * S, H)

    # qkv = self.c_attn(x), emitted in bf16 so the wrapper transpose and the
    # attention kernel move half the bytes.
    qkv = linear(
        x2d, params["c_attn_w"], params["c_attn_b"], out_dtype=jnp.bfloat16
    )  # (B*S, 3H) bf16

    # 'b s (three h d) -> b three h s d' : single bf16 transpose; q/k/v
    # selection happens inside the attention kernel's BlockSpec index_maps.
    # TODO(synk): fuse the head split/merge into the linears (H grid axis
    # feeding c_proj's K dimension) to remove these two XLA copies entirely.
    qkv = qkv.reshape(B, S, 3, num_heads, D).transpose(0, 2, 3, 1, 4)

    # flash attention (causal), per (batch, head) — bf16 output.
    o = flash_attention(qkv)  # (B, nH, S, D)

    # 'b h s d -> b s (h d)' (bf16 copy)
    o = o.transpose(0, 2, 1, 3).reshape(B * S, H)

    # attn_out = self.c_proj(out) — back to f32 to match the module's output.
    out = linear(o, params["c_proj_w"], params["c_proj_b"], out_dtype=jnp.float32)

    # TODO(synk): resid_dropout omitted — identity in eval mode.
    return out.reshape(B, S, H)


# ----------------------------------- main -------------------------------------
if __name__ == "__main__":
    # Small config consistent with GPT2Attention
    B, S = 2, 8
    hidden_dim = 32
    num_heads = 4

    key = jax.random.PRNGKey(0)
    kx, k1, k2, k3, k4 = jax.random.split(key, 5)

    # Deterministic parameter init (weights stored as (in, out) for x @ W + b)
    std = 0.02
    params = {
        "c_attn_w": jax.random.normal(k1, (hidden_dim, 3 * hidden_dim), jnp.float32) * std,
        "c_attn_b": jax.random.normal(k2, (3 * hidden_dim,), jnp.float32) * std,
        "c_proj_w": jax.random.normal(k3, (hidden_dim, hidden_dim), jnp.float32) * std,
        "c_proj_b": jax.random.normal(k4, (hidden_dim,), jnp.float32) * std,
    }

    x = jax.random.normal(kx, (B, S, hidden_dim), jnp.float32)

    out = gpt2_attention_forward(x, params, num_heads)
    out = jax.block_until_ready(out)
    assert out.shape == (B, S, hidden_dim), out.shape
    assert bool(jnp.all(jnp.isfinite(out)))
    print("KERNEL_OK")
</pallas_src>

<mosaic_0001>
module attributes {stable_mosaic.version = 11 : i64} {
  func.func @_linear_kernel_k1(%arg0: i32, %arg1: i32, %arg2: memref<16x32xf32, #tpu.memory_space<vmem>>, %arg3: memref<32x96xf32, #tpu.memory_space<vmem>>, %arg4: memref<1x96xf32, #tpu.memory_space<vmem>>, %arg5: memref<16x96xbf16, #tpu.memory_space<vmem>>) attributes {dimension_semantics = [#tpu.dimension_semantics<parallel>, #tpu.dimension_semantics<parallel>], iteration_bounds = array<i64: 1, 1>, scalar_prefetch = 0 : i64, scratch_operands = 0 : i64, tpu.core_type = #tpu.core_type<tc>, window_params = [{transform_indices = @transform_0, window_bounds = array<i64: 16, 32>}, {transform_indices = @transform_1, window_bounds = array<i64: 32, 96>}, {transform_indices = @transform_2, window_bounds = array<i64: 1, 96>}, {transform_indices = @transform_3, window_bounds = array<i64: 16, 96>}]} {
    %c0 = arith.constant 0 : index
    %c0_0 = arith.constant 0 : index
    %0 = vector.load %arg2[%c0, %c0_0] : memref<16x32xf32, #tpu.memory_space<vmem>>, vector<16x32xf32>
    %1 = arith.truncf %0 : vector<16x32xf32> to vector<16x32xbf16>
    %c0_1 = arith.constant 0 : index
    %c0_2 = arith.constant 0 : index
    %2 = vector.load %arg3[%c0_1, %c0_2] : memref<32x96xf32, #tpu.memory_space<vmem>>, vector<32x96xf32>
    %3 = arith.truncf %2 : vector<32x96xf32> to vector<32x96xbf16>
    %cst = arith.constant dense<0.000000e+00> : vector<16x96xf32>
    %4 = tpu.matmul %1, %3, %cst {dimension_numbers = #tpu.dot_dimension_numbers<[1], [0], [0], [1], [0, 0, 1, 1], [], []>} : vector<16x32xbf16>, vector<32x96xbf16>, vector<16x96xf32> -> vector<16x96xf32>
    %c0_3 = arith.constant 0 : index
    %c0_4 = arith.constant 0 : index
    %5 = vector.load %arg4[%c0_3, %c0_4] : memref<1x96xf32, #tpu.memory_space<vmem>>, vector<1x96xf32>
    %6 = vector.broadcast %5 : vector<1x96xf32> to vector<16x96xf32>
    %7 = arith.addf %4, %6 : vector<16x96xf32>
    %8 = arith.truncf %7 : vector<16x96xf32> to vector<16x96xbf16>
    %c0_5 = arith.constant 0 : index
    %c0_6 = arith.constant 0 : index
    %9 = vector.load %arg5[%c0_5, %c0_6] : memref<16x96xbf16, #tpu.memory_space<vmem>>, vector<16x96xbf16>
    tpu.vector_store %arg5[%c0_5, %c0_6], %8 {strides = array<i32>} : memref<16x96xbf16, #tpu.memory_space<vmem>>, vector<16x96xbf16>,
    return
  }
  func.func @transform_0(%arg0: i32, %arg1: i32) -> (i32, i32) {
    %c0_i32 = arith.constant 0 : i32
    %c0_i32_0 = arith.constant 0 : i32
    return %arg0, %c0_i32 : i32, i32
  }
  func.func @transform_1(%arg0: i32, %arg1: i32) -> (i32, i32) {
    %c0_i32 = arith.constant 0 : i32
    %c0_i32_0 = arith.constant 0 : i32
    return %c0_i32, %arg1 : i32, i32
  }
  func.func @transform_2(%arg0: i32, %arg1: i32) -> (i32, i32) {
    %c0_i32 = arith.constant 0 : i32
    %c0_i32_0 = arith.constant 0 : i32
    return %c0_i32, %arg1 : i32, i32
  }
  func.func @transform_3(%arg0: i32, %arg1: i32) -> (i32, i32) {
    %c0_i32 = arith.constant 0 : i32
    return %arg0, %arg1 : i32, i32
  }
}

</mosaic_0001>

<llo_original>
// kernel: tpu_custom_call.1
$region0: #{tpu_custom_call.1}
  #allocation0 [shape = 'u32[]', space=smem, size = 0x4, offset = 0x4, fixed_abs, tag = 'smem constant byte address 0x4 - core index']
  #allocation1 [shape = 'u32[144,128]{1,0:T(1,128)}', space=vmem, size = 0x12000, scoped, tag = 'internal scratch']
  %s0 = inlined_call_operand.hbm [shape: f32[16,32], index: 0, kind: input, shape index: {}]
  %s1 = inlined_call_operand.hbm [shape: f32[32,96], index: 1, kind: input, shape index: {}]
  %s2 = inlined_call_operand.vmem [shape: f32[1,96], index: 2, kind: input, shape index: {}]
  %s3 = inlined_call_operand.hbm [shape: bf16[16,96], index: 3, kind: output, shape index: {}]
  %s4 = sld [smem:[#allocation0]]
  $region30: #{tpu_custom_call.1} parent=0
    _
  %s6 = ssub.s32 1, %s4
  %s7 = scalar_select 0, %s6, %s4
  $region1: #{tpu_custom_call.1} parent=0
    #allocation2 [shape = 'u8[8192]{0}', space=vmem, size = 0x2000, scoped, tag = 'input window, operand 0, single buffered']
    #allocation3 [shape = 's32[1]{0}', space=sflag, size = 0x4, scoped, tag = 'scoped memory for tpu_custom_call.1']
    #allocation4 [shape = 's32[1]{0}', space=sflag, size = 0x4, scoped, tag = 'scoped memory for tpu_custom_call.1']
    #allocation5 [shape = 'u8[16384]{0}', space=vmem, size = 0x4000, scoped, tag = 'input window, operand 1, single buffered']
    #allocation6 [shape = 's32[1]{0}', space=sflag, size = 0x4, scoped, tag = 'scoped memory for tpu_custom_call.1']
    #allocation7 [shape = 'u8[4096]{0}', space=vmem, size = 0x1000, scoped, tag = 'output window, operand 0, single buffered']
    %8 = vsyncpa [#allocation3], 0
    %9 = vsyncpa [#allocation6], 0
    %10 = vsyncpa [#allocation4], 0
    // Predicated region
    $region2: #{tpu_custom_call.1} parent=1 // pred_check
      _
    $region3: #{tpu_custom_call.1} parent=1 // pred_check_branch
      %12 = sbr.rel (0) target = $region5
    $region4: #{tpu_custom_call.1} parent=1 // pred_region
      %s14 = ssub.s32 256, 256
      %15 = vsyncadd [#allocation3], %s14
      %s16 = sshll.u32 [#allocation2], 4
      %s17 = int_to_ptr.vmem [resolvable:$true] %s16
      %22 = dma.hbm_to_vmem [thread:$0]  %s0, 256, %s17, [#allocation3], 128, 128, 8
    $region5: #{tpu_custom_call.1} parent=1 // pred_fallthru
      _
    // Predicated region
    $region6: #{tpu_custom_call.1} parent=1 // pred_check
      _
    $region7: #{tpu_custom_call.1} parent=1 // pred_check_branch
      %24 = sbr.rel (0) target = $region9
    $region8: #{tpu_custom_call.1} parent=1 // pred_region
      %s26 = ssub.s32 512, 512
      %27 = vsyncadd [#allocation6], %s26
      %s28 = sshll.u32 [#allocation5], 4
      %s29 = int_to_ptr.vmem [resolvable:$true] %s28
      %34 = dma.hbm_to_vmem [thread:$0]  %s1, 512, %s29, [#allocation6], 128, 128, 8
    $region9: #{tpu_custom_call.1} parent=1 // pred_fallthru
      _
    // Predicated region
    $region10: #{tpu_custom_call.1} parent=1 // pred_check
      _
    $region11: #{tpu_custom_call.1} parent=1 // pred_check_branch
      %36 = sbr.rel (0) target = $region13
    $region12: #{tpu_custom_call.1} parent=1 // pred_region
      _
    $region13: #{tpu_custom_call.1} parent=1 // pred_fallthru
      _
    // Predicated region
    $region14: #{tpu_custom_call.1} parent=1 // pred_check
      _
    $region15: #{tpu_custom_call.1} parent=1 // pred_check_branch
      %38 = sbr.rel (0) target = $region17
    $region16: #{tpu_custom_call.1} parent=1 // pred_region
      %39 = dma.done [#allocation3], 256
    $region17: #{tpu_custom_call.1} parent=1 // pred_fallthru
      _
    // Predicated region
    $region18: #{tpu_custom_call.1} parent=1 // pred_check
      _
    $region19: #{tpu_custom_call.1} parent=1 // pred_check_branch
      %41 = sbr.rel (0) target = $region21
    $region20: #{tpu_custom_call.1} parent=1 // pred_region
      %42 = dma.done [#allocation6], 512
    $region21: #{tpu_custom_call.1} parent=1 // pred_fallthru
      _
    %v44 = vld [vmem:[#allocation2] sm:$0xff]
    %v45 = vld [vmem:[#allocation2 + $0x8] sm:$0xff]
    %v46 = vpack.c.bf16 %v45, %v44
    %v47 = vld [vmem:[#allocation5] sm:$0xff]
    %v48 = vld [vmem:[#allocation5 + $0x8] sm:$0xff]
    %v49 = vld [vmem:[#allocation5 + $0x10] sm:$0xff]
    %v50 = vld [vmem:[#allocation5 + $0x18] sm:$0xff]
    %v51 = vpack.c.bf16 %v48, %v47
    %v52 = vpack.c.bf16 %v50, %v49
    %v53 = vld [vmem:[%s2] sm:$0x1]
    %v55 = vlaneseq
    %v56 = vshrl.u32 %v55, 7
    %v57 = vsub.s32 0, %v56
    %v58 = vrot.slane %v53, %v57
    %vm60 = vcmask 261120
    %v62 = vsel %vm60, %v46, 0
    %64 = vmatprep.subr.bf16.mxu0 0
    %65 = vmatpush1.bf16.msra.mxu0 %v51
    %66 = vmatprep.subr.bf16.mxu0 0
    %67 = vmatpush1.bf16.msra.mxu0 %v52
    %68 = vmatprep.subr.bf16.mxu0 0
    %69 = vmatpush1.bf16.msra.mxu0 0
    %70 = vmatprep.subr.bf16.mxu0 0
    %71 = vmatpush1.bf16.msra.mxu0 0
    %72 = vmatprep.subr.bf16.mxu0 0
    %73 = vmatpush1.bf16.msra.mxu0 0
    %74 = vmatprep.subr.bf16.mxu0 0
    %75 = vmatpush1.bf16.msra.mxu0 0
    %76 = vmatprep.subr.bf16.mxu0 0
    %77 = vmatpush1.bf16.msra.mxu0 0
    %78 = vmatprep.subr.bf16.mxu0 0
    %79 = vmatpush1.bf16.msra.mxu0 0
    %80 = vmatprep.subr.bf16.mxu0 0
    %81 = vmatpush1.bf16.msra.mxu0 0
    %82 = vmatprep.subr.bf16.mxu0 0
    %83 = vmatpush1.bf16.msra.mxu0 0
    %84 = vmatprep.subr.bf16.mxu0 0
    %85 = vmatpush1.bf16.msra.mxu0 0
    %86 = vmatprep.subr.bf16.mxu0 0
    %87 = vmatpush1.bf16.msra.mxu0 0
    %88 = vmatprep.subr.bf16.mxu0 0
    %89 = vmatpush1.bf16.msra.mxu0 0
    %90 = vmatprep.subr.bf16.mxu0 0
    %91 = vmatpush1.bf16.msra.mxu0 0
    %92 = vmatprep.subr.bf16.mxu0 0
    %93 = vmatpush1.bf16.msra.mxu0 0
    %94 = vmatprep.subr.bf16.mxu0 0
    %95 = vmatpush1.bf16.msra.mxu0 0
    %96 = vmatprep.mubr.bf16.mxu0 0
    %97 = vmatmul.mubr.bf16.gmra.mrb[0].mxu0 %v62
    %v98 = vpop.f32.mrb[0].mxu0
    %v99 = vadd.f32 %v58, %v98
    %v100 = vpop.f32.mrb[0].mxu0
    %v101 = vpop.f32.mrb[0].mxu0
    %v102 = vadd.f32 %v58, %v101
    %v103 = vpop.f32.mrb[0].mxu0
    %104 = vdwg.mxu0
    %v105 = vpack.c.bf16 %v102, %v99
    %v107 = vunpack.c.l.b16 %v105
    %v108 = vunpack.c.h.b16 %v105
    %v109 = vpack.c.b16 %v107, %v107
    %v110 = vpack.c.b16 %v108, %v108
    %vm113 = vcmask 781312
    %114 = vst.msk [vmem:[#allocation7] sm:$0xf] %vm113, %v109
    %115 = vst.msk [vmem:[#allocation7 + $0x4] sm:$0xf] %vm113, %v110
    // Predicated region
    $region22: #{tpu_custom_call.1} parent=1 // pred_check
      _
    $region23: #{tpu_custom_call.1} parent=1 // pred_check_branch
      %117 = sbr.rel (0) target = $region25
    $region24: #{tpu_custom_call.1} parent=1 // pred_region
      %s119 = ssub.s32 128, 128
      %120 = vsyncadd [#allocation4], %s119
      %s121 = sshll.u32 [#allocation7], 4
      %s122 = int_to_ptr.vmem [resolvable:$true] %s121
      %127 = dma.vmem_to_hbm [thread:$0]  %s122, 128, %s3, [#allocation4], 64, 64, 4
    $region25: #{tpu_custom_call.1} parent=1 // pred_fallthru
      _
    // Predicated region
    $region26: #{tpu_custom_call.1} parent=1 // pred_check
      _
    $region27: #{tpu_custom_call.1} parent=1 // pred_check_branch
      %129 = sbr.rel (0) target = $region29
    $region28: #{tpu_custom_call.1} parent=1 // pred_region
      %130 = dma.done [#allocation4], 128
    $region29: #{tpu_custom_call.1} parent=1 // pred_fallthru
      _
    %131 = vsyncpa [#allocation3], 1
    %132 = vsyncpa [#allocation6], 1
    %133 = vsyncpa [#allocation4], 1

</llo_original>
